<compile_context>
chip_gen: v6e
topology: v6e:2x2x1
jax: 0.10.0
libtpu: 0.0.40
codegen_flags: <defaults>
</compile_context>

<pallas_src>
import jax
import jax.numpy as jnp
from jax.experimental import pallas as pl
from jax.experimental.pallas import tpu as pltpu


# ---------------------------------------------------------------------------
# Tiny path: OUT == 1 (the actual SimpleModel shapes). Pure VPU/XLU, no MXU.
# ---------------------------------------------------------------------------
def _linear_out1_kernel(x_ref, w_ref, b_ref, o_ref):
    # x_ref: (B, IN) VMEM, w_ref: (1, IN) VMEM, b_ref: (1,) SMEM, o_ref: (B, 1)
    prod = x_ref[...] * w_ref[...]                     # VPU, sublane-broadcast of w
    row = jnp.sum(prod, axis=-1, keepdims=True)        # XLU cross-lane reduce -> (B, 1)
    o_ref[...] = (row + b_ref[0]).astype(o_ref.dtype)  # scalar bias from SMEM


def _linear_out1(x, weight, bias):
    B, IN = x.shape
    OUT = weight.shape[0]  # == 1
    return pl.pallas_call(
        _linear_out1_kernel,
        out_shape=jax.ShapeDtypeStruct((B, OUT), x.dtype),
        grid_spec=pltpu.PrefetchScalarGridSpec(
            num_scalar_prefetch=0,
            grid=(1,),
            in_specs=[
                pl.BlockSpec((B, IN), lambda i: (0, 0)),
                pl.BlockSpec((OUT, IN), lambda i: (0, 0)),
                pl.BlockSpec(memory_space=pltpu.MemorySpace.SMEM),  # bias scalar
            ],
            out_specs=pl.BlockSpec((B, OUT), lambda i: (0, 0)),
        ),
        compiler_params=pltpu.CompilerParams(
            dimension_semantics=("arbitrary",),
        ),
    )(x, weight, bias)


# ---------------------------------------------------------------------------
# Tiled MXU path: grid (M/tm, N/tn, K/tk), K reduction last, M/N parallel.
# Weight is pre-transposed to (K, N) so the MXU gets a non-transposed RHS.
# ---------------------------------------------------------------------------
def _linear_tiled_f32out_kernel(x_ref, w_ref, b_ref, o_ref):
    # x_ref: (tm, tk), w_ref: (tk, tn), b_ref: (1, tn), o_ref: (tm, tn) f32.
    # The output block index is constant across k -> resident accumulator.
    k = pl.program_id(2)

    @pl.when(k == 0)
    def _():
        o_ref[...] = jnp.zeros_like(o_ref)

    o_ref[...] += jnp.dot(x_ref[...], w_ref[...], preferred_element_type=jnp.float32)

    @pl.when(k == pl.num_programs(2) - 1)
    def _():
        o_ref[...] += b_ref[...]


def _linear_tiled_acc_kernel(x_ref, w_ref, b_ref, o_ref, acc_ref):
    # Narrow output dtypes: accumulate in an f32 VMEM scratch, cast once.
    k = pl.program_id(2)

    @pl.when(k == 0)
    def _():
        acc_ref[...] = jnp.zeros_like(acc_ref)

    acc_ref[...] += jnp.dot(x_ref[...], w_ref[...], preferred_element_type=jnp.float32)

    @pl.when(k == pl.num_programs(2) - 1)
    def _():
        o_ref[...] = (acc_ref[...] + b_ref[...]).astype(o_ref.dtype)


_TILE_CAP_BYTES = 30 << 20    # per-step double-buffered footprint cap (v5e/v7x safe)
_VMEM_LIMIT_BYTES = 48 << 20  # > scoped defaults (16/32 MiB), < v7x 64 MiB physical


def _footprint_bytes(tm, tn, tk, itemsize, f32_out_resident):
    # double-buffered x/w/bias blocks + resident f32 output (or acc scratch + out)
    in_bytes = 2 * (tm * tk + tk * tn) * itemsize + 2 * tn * 4
    out_bytes = tm * tn * (4 + (0 if f32_out_resident else itemsize))
    return in_bytes + out_bytes


def _divisor_from(dim, candidates):
    for c in candidates:
        if dim % c == 0:
            return c
    return None


def _select_tiles(M, N, K, itemsize, f32_out):
    """Pick (tm, tn, tk) for the tiled MXU path, or None if not tileable."""
    # tm: 128-multiple tiles, or the full (small) batch as one block.
    tm = _divisor_from(M, (512, 256, 128))
    if tm is None:
        if M <= 512:
            tm = M  # full-extent block: (8,128) rule satisfied by "== full dim"
        else:
            return None
    # tn: lane-dense 128-multiples preferred (unmasked vst), else full extent.
    tn = _divisor_from(N, (512, 256, 128))
    if tn is None:
        if N <= 512:
            tn = N
        else:
            return None
    # tk: big reduction tiles amortize the ~0.35us/grid-step overhead.
    tk = _divisor_from(K, (2048, 1024, 512, 256, 128))
    if tk is None:
        if K <= 2048:
            tk = K
        else:
            return None

    def shrinkable(t):
        return t % 256 == 0  # halving keeps it a 128-multiple divisor

    # Shrink (tk first, then tn, then tm) until the footprint fits the cap.
    while _footprint_bytes(tm, tn, tk, itemsize, f32_out) > _TILE_CAP_BYTES:
        if shrinkable(tk):
            tk //= 2
        elif shrinkable(tn):
            tn //= 2
        elif shrinkable(tm):
            tm //= 2
        else:
            return None

    # v7x megacore: make sure the parallel (i, j) grid has >= 2 blocks.
    if (M // tm) * (N // tn) < 2:
        if shrinkable(tn):
            tn //= 2
        elif shrinkable(tm):
            tm //= 2

    return tm, tn, tk


def _linear_tiled(x, w_t, bias, *, tm, tn, tk):
    M, K = x.shape
    N = w_t.shape[1]
    b2 = bias.reshape(1, N).astype(jnp.float32)
    f32_out = x.dtype == jnp.float32
    kernel = _linear_tiled_f32out_kernel if f32_out else _linear_tiled_acc_kernel
    scratch = [] if f32_out else [pltpu.VMEM((tm, tn), jnp.float32)]
    return pl.pallas_call(
        kernel,
        out_shape=jax.ShapeDtypeStruct((M, N), x.dtype),
        grid_spec=pltpu.PrefetchScalarGridSpec(
            num_scalar_prefetch=0,
            grid=(M // tm, N // tn, K // tk),
            in_specs=[
                pl.BlockSpec((tm, tk), lambda i, j, k: (i, k)),
                pl.BlockSpec((tk, tn), lambda i, j, k: (k, j)),
                pl.BlockSpec((1, tn), lambda i, j, k: (0, j)),
            ],
            out_specs=pl.BlockSpec((tm, tn), lambda i, j, k: (i, j)),
            scratch_shapes=scratch,
        ),
        compiler_params=pltpu.CompilerParams(
            dimension_semantics=("parallel", "parallel", "arbitrary"),
            vmem_limit_bytes=_VMEM_LIMIT_BYTES,
        ),
    )(x, w_t, b2)


# ---------------------------------------------------------------------------
# Whole-array fallback (small, non-aligned OUT > 1 shapes; single VMEM block).
# ---------------------------------------------------------------------------
def _linear_whole_kernel(x_ref, w_ref, b_ref, o_ref):
    acc = jnp.dot(x_ref[...], w_ref[...], preferred_element_type=jnp.float32)
    o_ref[...] = (acc + b_ref[...]).astype(o_ref.dtype)


def _linear_whole(x, w_t, bias):
    B, IN = x.shape
    OUT = w_t.shape[1]
    b2 = bias.reshape(1, OUT).astype(jnp.float32)
    return pl.pallas_call(
        _linear_whole_kernel,
        out_shape=jax.ShapeDtypeStruct((B, OUT), x.dtype),
        grid_spec=pltpu.PrefetchScalarGridSpec(
            num_scalar_prefetch=0,
            grid=(1,),
            in_specs=[
                pl.BlockSpec((B, IN), lambda i: (0, 0)),
                pl.BlockSpec((IN, OUT), lambda i: (0, 0)),
                pl.BlockSpec((1, OUT), lambda i: (0, 0)),
            ],
            out_specs=pl.BlockSpec((B, OUT), lambda i: (0, 0)),
        ),
        compiler_params=pltpu.CompilerParams(
            dimension_semantics=("arbitrary",),
        ),
    )(x, w_t, bias.reshape(1, OUT).astype(x.dtype) if False else b2)


def linear_pallas(x, weight, bias):
    """Forward pass of nn.Linear: x @ weight.T + bias (weight is (OUT, IN))."""
    B, IN = x.shape
    OUT, IN_w = weight.shape
    assert IN == IN_w, "weight/in_features mismatch"
    assert bias.shape == (OUT,)
    itemsize = jnp.dtype(x.dtype).itemsize

    # The actual SimpleModel shape (OUT == 1, tiny operands): pure VPU path.
    if OUT == 1 and B * IN * itemsize <= (2 << 20):
        return _linear_out1(x, weight, bias)

    tiles = _select_tiles(B, OUT, IN, itemsize, x.dtype == jnp.float32)
    if tiles is not None:
        # One-time weight transpose outside the kernel (static parameter,
        # amortized across calls) -> MXU consumes a non-transposed RHS.
        w_t = jnp.transpose(weight)
        tm, tn, tk = tiles
        return _linear_tiled(x, w_t, bias, tm=tm, tn=tn, tk=tk)

    # Small, non-aligned shapes that still fit one VMEM block.
    whole_bytes = 2 * (B * IN + IN * OUT + B * OUT) * itemsize
    if whole_bytes <= (8 << 20):
        return _linear_whole(x, jnp.transpose(weight), bias)

    # TODO(synk): pad-and-mask tiling for large non-128-aligned Linear shapes;
    # fall back to XLA rather than blow scoped VMEM with a single-block kernel.
    return x @ weight.T + bias


if __name__ == "__main__":
    key = jax.random.PRNGKey(0)
    kx, kw, kb, kx2, kw2, kb2, kx3, kw3, kb3 = jax.random.split(key, 9)

    # --- The module's actual shapes: nn.Linear(10, 1), batch of 8 ----------
    batch, in_features, out_features = 8, 10, 1
    bound = 1.0 / (in_features ** 0.5)
    weight = jax.random.uniform(kw, (out_features, in_features),
                                minval=-bound, maxval=bound, dtype=jnp.float32)
    bias = jax.random.uniform(kb, (out_features,),
                              minval=-bound, maxval=bound, dtype=jnp.float32)
    x = jax.random.normal(kx, (batch, in_features), dtype=jnp.float32)

    out = linear_pallas(x, weight, bias)
    jax.block_until_ready(out)
    ref = x @ weight.T + bias
    assert out.shape == (batch, out_features)
    assert jnp.allclose(out, ref, atol=1e-5, rtol=1e-5)

    # --- Tiled MXU path at a realistic Linear size (pre-transposed RHS) ----
    # Small-integer inputs keep both the kernel and the XLA reference exact.
    M, K, N = 512, 1024, 256
    x_big = jax.random.randint(kx2, (M, K), -2, 3).astype(jnp.float32)
    w_big = jax.random.randint(kw2, (N, K), -2, 3).astype(jnp.float32)
    b_big = jax.random.uniform(kb2, (N,), dtype=jnp.float32)

    out_big = linear_pallas(x_big, w_big, b_big)
    jax.block_until_ready(out_big)
    ref_big = x_big @ w_big.T + b_big
    assert out_big.shape == (M, N)
    assert jnp.allclose(out_big, ref_big, atol=1e-3, rtol=1e-3)

    # --- Small-batch x large-weight route: tm = B streaming tiled path -----
    Ms, Ks, Ns = 8, 512, 256
    x_sb = jax.random.randint(kx3, (Ms, Ks), -2, 3).astype(jnp.float32)
    w_sb = jax.random.randint(kw3, (Ns, Ks), -2, 3).astype(jnp.float32)
    b_sb = jax.random.uniform(kb3, (Ns,), dtype=jnp.float32)

    out_sb = linear_pallas(x_sb, w_sb, b_sb)
    jax.block_until_ready(out_sb)
    ref_sb = x_sb @ w_sb.T + b_sb
    assert out_sb.shape == (Ms, Ns)
    assert jnp.allclose(out_sb, ref_sb, atol=1e-3, rtol=1e-3)

    print("KERNEL_OK")
</pallas_src>

<mosaic_0001>
module attributes {stable_mosaic.version = 11 : i64} {
  func.func @_linear_out1_kernel(%arg0: i32, %arg1: memref<8x10xf32, #tpu.memory_space<vmem>>, %arg2: memref<1x10xf32, #tpu.memory_space<vmem>>, %arg3: memref<1xf32, #tpu.memory_space<smem>>, %arg4: memref<8x1xf32, #tpu.memory_space<vmem>>) attributes {dimension_semantics = [#tpu.dimension_semantics<arbitrary>], iteration_bounds = array<i64: 1>, scalar_prefetch = 0 : i64, scratch_operands = 0 : i64, tpu.core_type = #tpu.core_type<tc>, window_params = [{pipeline_mode = #tpu.pipeline_mode<synchronous>, transform_indices = @transform_0, window_bounds = array<i64: 8, 10>}, {pipeline_mode = #tpu.pipeline_mode<synchronous>, transform_indices = @transform_1, window_bounds = array<i64: 1, 10>}, {transform_indices = @transform_2, window_bounds = array<i64: 1>}, {pipeline_mode = #tpu.pipeline_mode<synchronous>, transform_indices = @transform_3, window_bounds = array<i64: 8, 1>}]} {
    %c0 = arith.constant 0 : index
    %c0_0 = arith.constant 0 : index
    %0 = vector.load %arg1[%c0, %c0_0] : memref<8x10xf32, #tpu.memory_space<vmem>>, vector<8x10xf32>
    %c0_1 = arith.constant 0 : index
    %c0_2 = arith.constant 0 : index
    %1 = vector.load %arg2[%c0_1, %c0_2] : memref<1x10xf32, #tpu.memory_space<vmem>>, vector<1x10xf32>
    %2 = vector.broadcast %1 : vector<1x10xf32> to vector<8x10xf32>
    %3 = arith.mulf %0, %2 : vector<8x10xf32>
    %cst = arith.constant dense<0.000000e+00> : vector<8xf32>
    %4 = vector.multi_reduction <add>, %3, %cst [1] : vector<8x10xf32> to vector<8xf32>
    %5 = vector.shape_cast %4 : vector<8xf32> to vector<8x1xf32>
    %c0_3 = arith.constant 0 : index
    %6 = memref.load %arg3[%c0_3] : memref<1xf32, #tpu.memory_space<smem>>
    %7 = vector.broadcast %6 : f32 to vector<8x1xf32>
    %8 = arith.addf %5, %7 : vector<8x1xf32>
    %c0_4 = arith.constant 0 : index
    %c0_5 = arith.constant 0 : index
    %9 = vector.load %arg4[%c0_4, %c0_5] : memref<8x1xf32, #tpu.memory_space<vmem>>, vector<8x1xf32>
    tpu.vector_store %arg4[%c0_4, %c0_5], %8 {strides = array<i32>} : memref<8x1xf32, #tpu.memory_space<vmem>>, vector<8x1xf32>,
    return
  }
  func.func @transform_0(%arg0: i32) -> (i32, i32) {
    %c0_i32 = arith.constant 0 : i32
    %c0_i32_0 = arith.constant 0 : i32
    %c0_i32_1 = arith.constant 0 : i32
    return %c0_i32, %c0_i32_0 : i32, i32
  }
  func.func @transform_1(%arg0: i32) -> (i32, i32) {
    %c0_i32 = arith.constant 0 : i32
    %c0_i32_0 = arith.constant 0 : i32
    %c0_i32_1 = arith.constant 0 : i32
    return %c0_i32, %c0_i32_0 : i32, i32
  }
  func.func @transform_2(%arg0: i32) -> i32 {
    %c0_i32 = arith.constant 0 : i32
    %c0_i32_0 = arith.constant 0 : i32
    return %c0_i32 : i32
  }
  func.func @transform_3(%arg0: i32) -> (i32, i32) {
    %c0_i32 = arith.constant 0 : i32
    %c0_i32_0 = arith.constant 0 : i32
    %c0_i32_1 = arith.constant 0 : i32
    return %c0_i32, %c0_i32_0 : i32, i32
  }
}

</mosaic_0001>

<llo_original>
// kernel: tpu_custom_call.1
$region0: #{tpu_custom_call.1}
  #allocation0 [shape = 'u32[]', space=smem, size = 0x4, offset = 0x4, fixed_abs, tag = 'smem constant byte address 0x4 - core index']
  #allocation1 [shape = 'u32[144,128]{1,0:T(1,128)}', space=vmem, size = 0x12000, scoped, tag = 'internal scratch']
  #allocation2 [shape = 'f32[1]{0:T(128)S(6)}', space=smem, size = 0x200, scoped, tag = 'scoped memory for tpu_custom_call.1']
  %s0 = inlined_call_operand.hbm [shape: f32[8,10], index: 0, kind: input, shape index: {}]
  %s1 = inlined_call_operand.vmem [shape: f32[1,10], index: 1, kind: input, shape index: {}]
  %s2 = inlined_call_operand.<no memory space> [shape: f32[1], index: 2, kind: input, shape index: {}]
  %s3 = inlined_call_operand.vmem [shape: f32[8,1], index: 3, kind: output, shape index: {}]
  %s4 = sld [smem:[#allocation0]]
  $region26: #{tpu_custom_call.1} parent=0
    _
  %s6 = ssub.s32 1, %s4
  %s7 = scalar_select 0, %s6, %s4
  %8 = sst [smem:[#allocation2]] %s2
  $region1: #{tpu_custom_call.1} parent=0
    #allocation3 [shape = 'u8[4096]{0}', space=vmem, size = 0x1000, scoped, tag = 'input window, operand 0, single buffered']
    #allocation4 [shape = 's32[1]{0}', space=sflag, size = 0x4, scoped, tag = 'scoped memory for tpu_custom_call.1']
    %9 = vsyncpa [#allocation4], 0
    // Predicated region
    $region2: #{tpu_custom_call.1} parent=1 // pred_check
      _
    $region3: #{tpu_custom_call.1} parent=1 // pred_check_branch
      %11 = sbr.rel (0) target = $region5
    $region4: #{tpu_custom_call.1} parent=1 // pred_region
      %s13 = ssub.s32 128, 128
      %14 = vsyncadd [#allocation4], %s13
      %s16 = sshll.u32 [#allocation3], 4
      %s17 = int_to_ptr.vmem [resolvable:$true] %s16
      %19 = dma.hbm_to_vmem [thread:$0]  %s0, 128, %s17, [#allocation4]
    $region5: #{tpu_custom_call.1} parent=1 // pred_fallthru
      _
    // Predicated region
    $region6: #{tpu_custom_call.1} parent=1 // pred_check
      _
    $region7: #{tpu_custom_call.1} parent=1 // pred_check_branch
      %21 = sbr.rel (0) target = $region9
    $region8: #{tpu_custom_call.1} parent=1 // pred_region
      _
    $region9: #{tpu_custom_call.1} parent=1 // pred_fallthru
      _
    // Predicated region
    $region10: #{tpu_custom_call.1} parent=1 // pred_check
      _
    $region11: #{tpu_custom_call.1} parent=1 // pred_check_branch
      %23 = sbr.rel (0) target = $region13
    $region12: #{tpu_custom_call.1} parent=1 // pred_region
      _
    $region13: #{tpu_custom_call.1} parent=1 // pred_fallthru
      _
    // Predicated region
    $region14: #{tpu_custom_call.1} parent=1 // pred_check
      _
    $region15: #{tpu_custom_call.1} parent=1 // pred_check_branch
      %25 = sbr.rel (0) target = $region17
    $region16: #{tpu_custom_call.1} parent=1 // pred_region
      %26 = dma.done [#allocation4], 128
    $region17: #{tpu_custom_call.1} parent=1 // pred_fallthru
      _
    %v27 = vld [vmem:[#allocation3] sm:$0xff]
    %v28 = vld [vmem:[%s1] sm:$0x1]
    %v30 = vlaneseq
    %v31 = vshrl.u32 %v30, 7
    %v32 = vsub.s32 0, %v31
    %v33 = vrot.slane %v28, %v32
    %v35 = vmul.f32 %v27, %v33
    %vm36 = vcmask 80896
    %v37 = vsel %vm36, %v35, 0.0
    %38 = vadd.xlane.f32.xlu0 %v37
    %v39 = vpop.xlane.xlu0 %38
    %s40 = sld [smem:[#allocation2]]
    %v41 = vstv %s40
    %v42 = vadd.f32 %v39, %v41
    %vm43 = vcmask 7168
    %44 = vst.msk [vmem:[%s3] sm:$0xff] %vm43, %v42
    // Predicated region
    $region18: #{tpu_custom_call.1} parent=1 // pred_check
      _
    $region19: #{tpu_custom_call.1} parent=1 // pred_check_branch
      %46 = sbr.rel (0) target = $region21
    $region20: #{tpu_custom_call.1} parent=1 // pred_region
      _
    $region21: #{tpu_custom_call.1} parent=1 // pred_fallthru
      _
    // Predicated region
    $region22: #{tpu_custom_call.1} parent=1 // pred_check
      _
    $region23: #{tpu_custom_call.1} parent=1 // pred_check_branch
      %48 = sbr.rel (0) target = $region25
    $region24: #{tpu_custom_call.1} parent=1 // pred_region
      _
    $region25: #{tpu_custom_call.1} parent=1 // pred_fallthru
      _
    %49 = vsyncpa [#allocation4], 1

</llo_original>
